<compile_context>
chip_gen: v5e
topology: v5e:2x2
jax: 0.10.0
libtpu: 0.0.40
codegen_flags: <defaults>
</compile_context>

<pallas_src>
import math

import jax
import jax.numpy as jnp
from jax.experimental import pallas as pl
from jax.experimental.pallas import tpu as pltpu


def _round_up(x, m):
    return ((x + m - 1) // m) * m


def _linear_kernel(x_ref, wt_ref, b_ref, o_ref):
    """One row-tile of  y = x @ W^T + b.

    x_ref : [tm, in_dim]     VMEM
    wt_ref: [in_dim, emb_p]  VMEM (whole transposed weight, resident)
    b_ref : [1, emb_p]       VMEM float32 (broadcast over rows)
    o_ref : [tm, emb_p]      VMEM
    """
    acc = jnp.dot(x_ref[...], wt_ref[...], preferred_element_type=jnp.float32)
    o_ref[...] = (acc + b_ref[...]).astype(o_ref.dtype)


_VMEM_BUDGET = 24 * 1024 * 1024   # conservative working-set target (all gens)
_VMEM_LIMIT = 32 * 1024 * 1024    # explicit scoped limit (<= v7x's 64 MiB VMEM)


def _footprint_bytes(tm, in_dim, emb_p, x_bytes, w_bytes):
    # x tile + out tile are double-buffered by the pipeline; count W^T + bias
    # double-buffered too (worst case, if Buffered(1) is unavailable).
    io = 2 * tm * (in_dim + emb_p) * x_bytes
    consts = 2 * (in_dim * emb_p * w_bytes + emb_p * 4)
    return io + consts


def _choose_tiling(N, in_dim, emb_p, x_bytes, w_bytes, target_tm=512):
    """Pick (tm, steps): balanced row tiles within the VMEM budget."""
    steps = max(1, -(-N // target_tm))
    while True:
        tm = _round_up(-(-N // steps), 8)
        if tm <= 8 or _footprint_bytes(tm, in_dim, emb_p, x_bytes, w_bytes) <= _VMEM_BUDGET:
            return tm, steps
        steps += 1


def _build_linear_call(N_pad, in_dim, emb_p, tm, out_dtype, cost,
                       single_buffer_consts):
    const_kw = {"pipeline_mode": pl.Buffered(1)} if single_buffer_consts else {}
    grid = (N_pad // tm,)
    return pl.pallas_call(
        _linear_kernel,
        out_shape=jax.ShapeDtypeStruct((N_pad, emb_p), out_dtype),
        grid_spec=pltpu.PrefetchScalarGridSpec(
            num_scalar_prefetch=0,
            grid=grid,
            in_specs=[
                pl.BlockSpec((tm, in_dim), lambda i: (i, 0)),                  # x rows
                pl.BlockSpec((in_dim, emb_p), lambda i: (0, 0), **const_kw),   # full W^T
                pl.BlockSpec((1, emb_p), lambda i: (0, 0), **const_kw),        # bias
            ],
            out_specs=pl.BlockSpec((tm, emb_p), lambda i: (i, 0)),
        ),
        compiler_params=pltpu.CompilerParams(
            dimension_semantics=("parallel",),   # shards row tiles across TCs (v7x)
            vmem_limit_bytes=_VMEM_LIMIT,
        ),
        cost_estimate=cost,
    )


def linear_pallas(x, weight_t, bias2d, *, out_dim=None, target_tm=512):
    """y = x @ W^T + b with a lane-padded emb dimension.

    x        : [N, in_dim]
    weight_t : [in_dim, emb_p]   pre-transposed, emb_p % 128 == 0
    bias2d   : [1, emb_p]        float32
    out_dim  : true emb_dim; output is sliced back to [N, out_dim]
    """
    N, in_dim = x.shape
    in_dim_w, emb_p = weight_t.shape
    assert in_dim == in_dim_w
    assert emb_p % 128 == 0, "pad weight_t/bias columns to a multiple of 128"

    tm, steps = _choose_tiling(N, in_dim, emb_p,
                               x.dtype.itemsize, weight_t.dtype.itemsize,
                               target_tm=target_tm)
    N_pad = tm * steps
    if N_pad != N:
        x = jnp.pad(x, ((0, N_pad - N), (0, 0)))   # zero rows -> sliced off below

    cost = pl.CostEstimate(
        flops=2 * N_pad * in_dim * emb_p,
        transcendentals=0,
        bytes_accessed=(N_pad * in_dim * x.dtype.itemsize
                        + N_pad * emb_p * x.dtype.itemsize
                        + in_dim * emb_p * weight_t.dtype.itemsize
                        + emb_p * 4),
    )

    try:
        call = _build_linear_call(N_pad, in_dim, emb_p, tm, x.dtype, cost, True)
        y = call(x, weight_t, bias2d)
    except Exception:
        # pl.Buffered(1) not supported by this build: default double-buffering.
        call = _build_linear_call(N_pad, in_dim, emb_p, tm, x.dtype, cost, False)
        y = call(x, weight_t, bias2d)

    y = y[:N]
    if out_dim is not None and out_dim != emb_p:
        y = y[:, :out_dim]
    return y


class FeatureEncoder:
    """JAX/Pallas port of graphpoolinggarden FeatureEncoder."""

    def __init__(self, dataset_name, in_dim, emb_dim, key,
                 compute_dtype=jnp.float32):
        self.dataset = dataset_name
        self.in_dim = in_dim
        self.emb_dim = emb_dim
        self.compute_dtype = compute_dtype
        if self.dataset == 'ogbg-molhiv':
            # TODO(synk): AtomEncoder (OGB embedding-sum) requires the external
            # full_atom_feature_dims table; no clean in-script equivalent.
            raise NotImplementedError("AtomEncoder branch not implemented")

        # nn.Linear default init: U(-1/sqrt(in_dim), 1/sqrt(in_dim))
        kw, kb = jax.random.split(key)
        bound = 1.0 / math.sqrt(in_dim)
        self.weight = jax.random.uniform(kw, (emb_dim, in_dim), jnp.float32,
                                         -bound, bound)
        self.bias = jax.random.uniform(kb, (emb_dim,), jnp.float32,
                                       -bound, bound)

        # Hoisted out of the forward path: transpose once and pad the emb
        # (lane) dimension up to a multiple of 128 so kernel stores are
        # full-width vst rather than masked partial stores.
        emb_p = _round_up(emb_dim, 128)
        wt = self.weight.T.astype(compute_dtype)             # [in_dim, emb_dim]
        self.weight_t = jnp.pad(wt, ((0, 0), (0, emb_p - emb_dim)))
        self.bias2d = jnp.pad(self.bias.reshape(1, emb_dim),
                              ((0, 0), (0, emb_p - emb_dim)))  # stays float32
        self.emb_p = emb_p

    def __call__(self, x):
        # compute_dtype=jnp.bfloat16 halves HBM traffic / VMEM tiles on
        # v6e/v7x; accumulation stays f32 inside the kernel. Default f32
        # matches nn.Linear numerics exactly.
        x = x.astype(self.compute_dtype)
        return linear_pallas(x, self.weight_t, self.bias2d, out_dim=self.emb_dim)


if __name__ == "__main__":
    key = jax.random.PRNGKey(0)
    k_param, k_x1, k_x2 = jax.random.split(key, 3)

    # small shapes consistent with the module: in_dim=16 node feats, emb_dim=32
    in_dim, emb_dim = 16, 32
    enc = FeatureEncoder("synthetic_graph_dataset", in_dim, emb_dim, k_param)

    # case 1: 64 nodes -> single grid step (whole problem in one tile)
    N1 = 64
    x1 = jax.random.normal(k_x1, (N1, in_dim), jnp.float32)
    y1 = jax.block_until_ready(enc(x1))
    ref1 = x1 @ enc.weight.T + enc.bias
    assert y1.shape == (N1, emb_dim)
    assert jnp.allclose(y1, ref1, atol=1e-5, rtol=1e-5)

    # case 2: node count not a multiple of 8 (exercises tail padding path)
    N2 = 77
    x2 = jax.random.normal(k_x2, (N2, in_dim), jnp.float32)
    y2 = jax.block_until_ready(enc(x2))
    ref2 = x2 @ enc.weight.T + enc.bias
    assert y2.shape == (N2, emb_dim)
    assert jnp.allclose(y2, ref2, atol=1e-5, rtol=1e-5)

    print("KERNEL_OK")
</pallas_src>

<mosaic_0001>
module attributes {stable_mosaic.version = 11 : i64} {
  func.func @_linear_kernel(%arg0: i32, %arg1: memref<64x16xf32, #tpu.memory_space<vmem>>, %arg2: memref<16x128xf32, #tpu.memory_space<vmem>>, %arg3: memref<1x128xf32, #tpu.memory_space<vmem>>, %arg4: memref<64x128xf32, #tpu.memory_space<vmem>>) attributes {dimension_semantics = [#tpu.dimension_semantics<parallel>], iteration_bounds = array<i64: 1>, scalar_prefetch = 0 : i64, scratch_operands = 0 : i64, tpu.core_type = #tpu.core_type<tc>, window_params = [{transform_indices = @transform_0, window_bounds = array<i64: 64, 16>}, {pipeline_mode = #tpu.pipeline_mode<synchronous>, transform_indices = @transform_1, window_bounds = array<i64: 16, 128>}, {pipeline_mode = #tpu.pipeline_mode<synchronous>, transform_indices = @transform_2, window_bounds = array<i64: 1, 128>}, {transform_indices = @transform_3, window_bounds = array<i64: 64, 128>}]} {
    %c0 = arith.constant 0 : index
    %c0_0 = arith.constant 0 : index
    %0 = vector.load %arg1[%c0, %c0_0] : memref<64x16xf32, #tpu.memory_space<vmem>>, vector<64x16xf32>
    %c0_1 = arith.constant 0 : index
    %c0_2 = arith.constant 0 : index
    %1 = vector.load %arg2[%c0_1, %c0_2] : memref<16x128xf32, #tpu.memory_space<vmem>>, vector<16x128xf32>
    %cst = arith.constant dense<0.000000e+00> : vector<64x128xf32>
    %2 = tpu.matmul %0, %1, %cst {dimension_numbers = #tpu.dot_dimension_numbers<[1], [0], [0], [1], [0, 0, 1, 1], [], []>} : vector<64x16xf32>, vector<16x128xf32>, vector<64x128xf32> -> vector<64x128xf32>
    %c0_3 = arith.constant 0 : index
    %c0_4 = arith.constant 0 : index
    %3 = vector.load %arg3[%c0_3, %c0_4] : memref<1x128xf32, #tpu.memory_space<vmem>>, vector<1x128xf32>
    %4 = vector.broadcast %3 : vector<1x128xf32> to vector<64x128xf32>
    %5 = arith.addf %2, %4 : vector<64x128xf32>
    %c0_5 = arith.constant 0 : index
    %c0_6 = arith.constant 0 : index
    %6 = vector.load %arg4[%c0_5, %c0_6] : memref<64x128xf32, #tpu.memory_space<vmem>>, vector<64x128xf32>
    tpu.vector_store %arg4[%c0_5, %c0_6], %5 {strides = array<i32>} : memref<64x128xf32, #tpu.memory_space<vmem>>, vector<64x128xf32>,
    return
  }
  func.func @transform_0(%arg0: i32) -> (i32, i32) {
    %c0_i32 = arith.constant 0 : i32
    %c0_i32_0 = arith.constant 0 : i32
    return %arg0, %c0_i32 : i32, i32
  }
  func.func @transform_1(%arg0: i32) -> (i32, i32) {
    %c0_i32 = arith.constant 0 : i32
    %c0_i32_0 = arith.constant 0 : i32
    %c0_i32_1 = arith.constant 0 : i32
    return %c0_i32, %c0_i32_0 : i32, i32
  }
  func.func @transform_2(%arg0: i32) -> (i32, i32) {
    %c0_i32 = arith.constant 0 : i32
    %c0_i32_0 = arith.constant 0 : i32
    %c0_i32_1 = arith.constant 0 : i32
    return %c0_i32, %c0_i32_0 : i32, i32
  }
  func.func @transform_3(%arg0: i32) -> (i32, i32) {
    %c0_i32 = arith.constant 0 : i32
    %c0_i32_0 = arith.constant 0 : i32
    return %arg0, %c0_i32 : i32, i32
  }
}

module attributes {stable_mosaic.version = 11 : i64} {
  func.func @_linear_kernel(%arg0: i32, %arg1: memref<64x16xf32, #tpu.memory_space<vmem>>, %arg2: memref<16x128xf32, #tpu.memory_space<vmem>>, %arg3: memref<1x128xf32, #tpu.memory_space<vmem>>, %arg4: memref<64x128xf32, #tpu.memory_space<vmem>>) attributes {dimension_semantics = [#tpu.dimension_semantics<parallel>], iteration_bounds = array<i64: 1>, scalar_prefetch = 0 : i64, scratch_operands = 0 : i64, tpu.core_type = #tpu.core_type<tc>, window_params = [{transform_indices = @transform_0, window_bounds = array<i64: 64, 16>}, {pipeline_mode = #tpu.pipeline_mode<synchronous>, transform_indices = @transform_1, window_bounds = array<i64: 16, 128>}, {pipeline_mode = #tpu.pipeline_mode<synchronous>, transform_indices = @transform_2, window_bounds = array<i64: 1, 128>}, {transform_indices = @transform_3, window_bounds = array<i64: 64, 128>}]} {
    %c0 = arith.constant 0 : index
    %c0_0 = arith.constant 0 : index
    %0 = vector.load %arg1[%c0, %c0_0] : memref<64x16xf32, #tpu.memory_space<vmem>>, vector<64x16xf32>
    %c0_1 = arith.constant 0 : index
    %c0_2 = arith.constant 0 : index
    %1 = vector.load %arg2[%c0_1, %c0_2] : memref<16x128xf32, #tpu.memory_space<vmem>>, vector<16x128xf32>
    %cst = arith.constant dense<0.000000e+00> : vector<64x128xf32>
    %2 = tpu.matmul %0, %1, %cst {dimension_numbers = #tpu.dot_dimension_numbers<[1], [0], [0], [1], [0, 0, 1, 1], [], []>} : vector<64x16xf32>, vector<16x128xf32>, vector<64x128xf32> -> vector<64x128xf32>
    %c0_3 = arith.constant 0 : index
    %c0_4 = arith.constant 0 : index
    %3 = vector.load %arg3[%c0_3, %c0_4] : memref<1x128xf32, #tpu.memory_space<vmem>>, vector<1x128xf32>
    %4 = vector.broadcast %3 : vector<1x128xf32> to vector<64x128xf32>
    %5 = arith.addf %2, %4 : vector<64x128xf32>
    %c0_5 = arith.constant 0 : index
    %c0_6 = arith.constant 0 : index
    %6 = vector.load %arg4[%c0_5, %c0_6] : memref<64x128xf32, #tpu.memory_space<vmem>>, vector<64x128xf32>
    tpu.vector_store %arg4[%c0_5, %c0_6], %5 {strides = array<i32>} : memref<64x128xf32, #tpu.memory_space<vmem>>, vector<64x128xf32>,
    return
  }
  func.func @transform_0(%arg0: i32) -> (i32, i32) {
    %c0_i32 = arith.constant 0 : i32
    %c0_i32_0 = arith.constant 0 : i32
    return %arg0, %c0_i32 : i32, i32
  }
  func.func @transform_1(%arg0: i32) -> (i32, i32) {
    %c0_i32 = arith.constant 0 : i32
    %c0_i32_0 = arith.constant 0 : i32
    %c0_i32_1 = arith.constant 0 : i32
    return %c0_i32, %c0_i32_0 : i32, i32
  }
  func.func @transform_2(%arg0: i32) -> (i32, i32) {
    %c0_i32 = arith.constant 0 : i32
    %c0_i32_0 = arith.constant 0 : i32
    %c0_i32_1 = arith.constant 0 : i32
    return %c0_i32, %c0_i32_0 : i32, i32
  }
  func.func @transform_3(%arg0: i32) -> (i32, i32) {
    %c0_i32 = arith.constant 0 : i32
    %c0_i32_0 = arith.constant 0 : i32
    return %arg0, %c0_i32 : i32, i32
  }
}

</mosaic_0001>

<llo_original>
// kernel: tpu_custom_call.1
$region0: #{tpu_custom_call.1}
  #allocation0 [shape = 'u32[]', space=smem, size = 0x4, offset = 0x4, fixed_abs, tag = 'smem constant byte address 0x4 - core index']
  #allocation1 [shape = 'u32[72,128]{1,0:T(1,128)}', space=vmem, size = 0x9000, scoped, tag = 'internal scratch']
  %s0 = inlined_call_operand.vmem [shape: f32[64,16], index: 0, kind: input, shape index: {}]
  %s1 = inlined_call_operand.vmem [shape: f32[16,128], index: 1, kind: input, shape index: {}]
  %s2 = inlined_call_operand.vmem [shape: f32[1,128], index: 2, kind: input, shape index: {}]
  %s3 = inlined_call_operand.hbm [shape: f32[64,128], index: 3, kind: output, shape index: {}]
  %s4 = sld [smem:[#allocation0]]
  $region22: #{tpu_custom_call.1} parent=0
    _
  %s6 = ssub.s32 1, %s4
  %s7 = scalar_select 0, %s6, %s4
  $region1: #{tpu_custom_call.1} parent=0
    #allocation2 [shape = 'u8[32768]{0}', space=vmem, size = 0x8000, scoped, tag = 'output window, operand 0, single buffered']
    #allocation3 [shape = 's32[1]{0}', space=sflag, size = 0x4, scoped, tag = 'scoped memory for tpu_custom_call.1']
    %8 = vsyncpa [#allocation3], 0
    // Predicated region
    $region2: #{tpu_custom_call.1} parent=1 // pred_check
      _
    $region3: #{tpu_custom_call.1} parent=1 // pred_check_branch
      %10 = sbr.rel (0) target = $region5
    $region4: #{tpu_custom_call.1} parent=1 // pred_region
      _
    $region5: #{tpu_custom_call.1} parent=1 // pred_fallthru
      _
    // Predicated region
    $region6: #{tpu_custom_call.1} parent=1 // pred_check
      _
    $region7: #{tpu_custom_call.1} parent=1 // pred_check_branch
      %12 = sbr.rel (0) target = $region9
    $region8: #{tpu_custom_call.1} parent=1 // pred_region
      _
    $region9: #{tpu_custom_call.1} parent=1 // pred_fallthru
      _
    // Predicated region
    $region10: #{tpu_custom_call.1} parent=1 // pred_check
      _
    $region11: #{tpu_custom_call.1} parent=1 // pred_check_branch
      %14 = sbr.rel (0) target = $region13
    $region12: #{tpu_custom_call.1} parent=1 // pred_region
      _
    $region13: #{tpu_custom_call.1} parent=1 // pred_fallthru
      _
    %v15 = vld [vmem:[%s0] sm:$0xff]
    %v16 = vld [vmem:[%s0 + $0x8] sm:$0xff]
    %v17 = vld [vmem:[%s0 + $0x10] sm:$0xff]
    %v18 = vld [vmem:[%s0 + $0x18] sm:$0xff]
    %v19 = vld [vmem:[%s0 + $0x20] sm:$0xff]
    %v20 = vld [vmem:[%s0 + $0x28] sm:$0xff]
    %v21 = vld [vmem:[%s0 + $0x30] sm:$0xff]
    %v22 = vld [vmem:[%s0 + $0x38] sm:$0xff]
    %v23 = vld [vmem:[%s1] sm:$0xff]
    %v24 = vld [vmem:[%s1 + $0x8] sm:$0xff]
    %v25 = vld [vmem:[%s2] sm:$0x1]
    %v27 = vperm.slane %v25, 0
    %vm29 = vcmask 130048
    %v31 = vsel %vm29, %v15, 0
    %v34 = vsel %vm29, %v16, 0
    %v37 = vsel %vm29, %v17, 0
    %v40 = vsel %vm29, %v18, 0
    %v43 = vsel %vm29, %v19, 0
    %v46 = vsel %vm29, %v20, 0
    %v49 = vsel %vm29, %v21, 0
    %v52 = vsel %vm29, %v22, 0
    %54 = vmatpush.msra.mxu0 0.0
    %55 = vmatpush.msra.mxu0 0.0
    %56 = vmatpush.msra.mxu0 0.0
    %57 = vmatpush.msra.mxu0 0.0
    %58 = vmatpush.msra.mxu0 0.0
    %59 = vmatpush.msra.mxu0 0.0
    %60 = vmatpush.msra.mxu0 0.0
    %61 = vmatpush.msra.mxu0 0.0
    %62 = vmatpush.msra.mxu0 0.0
    %63 = vmatpush.msra.mxu0 0.0
    %64 = vmatpush.msra.mxu0 0.0
    %65 = vmatpush.msra.mxu0 0.0
    %66 = vmatpush.msra.mxu0 0.0
    %67 = vmatpush.msra.mxu0 0.0
    %68 = vmatpush.msra.mxu0 %v24
    %69 = vmatpush.msra.mxu0 %v23
    %70 = vmatmul.f32.gmra.mxu0 %v31
    %v71 = vpop.f32.mrf.mxu0
    %v72 = vadd.f32 %v27, %v71
    %73 = vmatmul.f32.gmra.mxu0 %v34
    %v74 = vpop.f32.mrf.mxu0
    %v75 = vadd.f32 %v27, %v74
    %76 = vmatmul.f32.gmra.mxu0 %v37
    %v77 = vpop.f32.mrf.mxu0
    %v78 = vadd.f32 %v27, %v77
    %79 = vmatmul.f32.gmra.mxu0 %v40
    %v80 = vpop.f32.mrf.mxu0
    %v81 = vadd.f32 %v27, %v80
    %82 = vmatmul.f32.gmra.mxu0 %v43
    %v83 = vpop.f32.mrf.mxu0
    %v84 = vadd.f32 %v27, %v83
    %85 = vmatmul.f32.gmra.mxu0 %v46
    %v86 = vpop.f32.mrf.mxu0
    %v87 = vadd.f32 %v27, %v86
    %88 = vmatmul.f32.gmra.mxu0 %v49
    %v89 = vpop.f32.mrf.mxu0
    %v90 = vadd.f32 %v27, %v89
    %91 = vmatmul.f32.gmra.mxu0 %v52
    %v92 = vpop.f32.mrf.mxu0
    %v93 = vadd.f32 %v27, %v92
    %94 = vdwg.mxu0
    %95 = vst [vmem:[#allocation2] sm:$0xff] %v72
    %96 = vst [vmem:[#allocation2 + $0x8] sm:$0xff] %v75
    %97 = vst [vmem:[#allocation2 + $0x10] sm:$0xff] %v78
    %98 = vst [vmem:[#allocation2 + $0x18] sm:$0xff] %v81
    %99 = vst [vmem:[#allocation2 + $0x20] sm:$0xff] %v84
    %100 = vst [vmem:[#allocation2 + $0x28] sm:$0xff] %v87
    %101 = vst [vmem:[#allocation2 + $0x30] sm:$0xff] %v90
    %102 = vst [vmem:[#allocation2 + $0x38] sm:$0xff] %v93
    // Predicated region
    $region14: #{tpu_custom_call.1} parent=1 // pred_check
      _
    $region15: #{tpu_custom_call.1} parent=1 // pred_check_branch
      %104 = sbr.rel (0) target = $region17
    $region16: #{tpu_custom_call.1} parent=1 // pred_region
      %106 = vsyncadd [#allocation3], 0
      %s107 = sshll.u32 [#allocation2], 4
      %s108 = int_to_ptr.vmem [resolvable:$true] %s107
      %s109 = sshll.u32 %s3, 4
      %s110 = int_to_ptr.hbm [resolvable:$true] %s109
      %115 = dma.vmem_to_hbm [thread:$0]  %s108, 1024, %s110, [#allocation3], 128, 128, 8
    $region17: #{tpu_custom_call.1} parent=1 // pred_fallthru
      _
    // Predicated region
    $region18: #{tpu_custom_call.1} parent=1 // pred_check
      _
    $region19: #{tpu_custom_call.1} parent=1 // pred_check_branch
      %117 = sbr.rel (0) target = $region21
    $region20: #{tpu_custom_call.1} parent=1 // pred_region
      %119 = dma.done [#allocation3], 1024
    $region21: #{tpu_custom_call.1} parent=1 // pred_fallthru
      _
    %120 = vsyncpa [#allocation3], 1

// kernel: tpu_custom_call.1
$region0: #{tpu_custom_call.1}
  #allocation0 [shape = 'u32[]', space=smem, size = 0x4, offset = 0x4, fixed_abs, tag = 'smem constant byte address 0x4 - core index']
  #allocation1 [shape = 'u32[72,128]{1,0:T(1,128)}', space=vmem, size = 0x9000, scoped, tag = 'internal scratch']
  %s0 = inlined_call_operand.vmem [shape: f32[64,16], index: 0, kind: input, shape index: {}]
  %s1 = inlined_call_operand.vmem [shape: f32[16,128], index: 1, kind: input, shape index: {}]
  %s2 = inlined_call_operand.vmem [shape: f32[1,128], index: 2, kind: input, shape index: {}]
  %s3 = inlined_call_operand.hbm [shape: f32[64,128], index: 3, kind: output, shape index: {}]
  %s4 = sld [smem:[#allocation0]]
  $region22: #{tpu_custom_call.1} parent=0
    _
  %s6 = ssub.s32 1, %s4
  %s7 = scalar_select 0, %s6, %s4
  $region1: #{tpu_custom_call.1} parent=0
    #allocation2 [shape = 'u8[32768]{0}', space=vmem, size = 0x8000, scoped, tag = 'output window, operand 0, single buffered']
    #allocation3 [shape = 's32[1]{0}', space=sflag, size = 0x4, scoped, tag = 'scoped memory for tpu_custom_call.1']
    %8 = vsyncpa [#allocation3], 0
    // Predicated region
    $region2: #{tpu_custom_call.1} parent=1 // pred_check
      _
    $region3: #{tpu_custom_call.1} parent=1 // pred_check_branch
      %10 = sbr.rel (0) target = $region5
    $region4: #{tpu_custom_call.1} parent=1 // pred_region
      _
    $region5: #{tpu_custom_call.1} parent=1 // pred_fallthru
      _
    // Predicated region
    $region6: #{tpu_custom_call.1} parent=1 // pred_check
      _
    $region7: #{tpu_custom_call.1} parent=1 // pred_check_branch
      %12 = sbr.rel (0) target = $region9
    $region8: #{tpu_custom_call.1} parent=1 // pred_region
      _
    $region9: #{tpu_custom_call.1} parent=1 // pred_fallthru
      _
    // Predicated region
    $region10: #{tpu_custom_call.1} parent=1 // pred_check
      _
    $region11: #{tpu_custom_call.1} parent=1 // pred_check_branch
      %14 = sbr.rel (0) target = $region13
    $region12: #{tpu_custom_call.1} parent=1 // pred_region
      _
    $region13: #{tpu_custom_call.1} parent=1 // pred_fallthru
      _
    %v15 = vld [vmem:[%s0] sm:$0xff]
    %v16 = vld [vmem:[%s0 + $0x8] sm:$0xff]
    %v17 = vld [vmem:[%s0 + $0x10] sm:$0xff]
    %v18 = vld [vmem:[%s0 + $0x18] sm:$0xff]
    %v19 = vld [vmem:[%s0 + $0x20] sm:$0xff]
    %v20 = vld [vmem:[%s0 + $0x28] sm:$0xff]
    %v21 = vld [vmem:[%s0 + $0x30] sm:$0xff]
    %v22 = vld [vmem:[%s0 + $0x38] sm:$0xff]
    %v23 = vld [vmem:[%s1] sm:$0xff]
    %v24 = vld [vmem:[%s1 + $0x8] sm:$0xff]
    %v25 = vld [vmem:[%s2] sm:$0x1]
    %v27 = vperm.slane %v25, 0
    %vm29 = vcmask 130048
    %v31 = vsel %vm29, %v15, 0
    %v34 = vsel %vm29, %v16, 0
    %v37 = vsel %vm29, %v17, 0
    %v40 = vsel %vm29, %v18, 0
    %v43 = vsel %vm29, %v19, 0
    %v46 = vsel %vm29, %v20, 0
    %v49 = vsel %vm29, %v21, 0
    %v52 = vsel %vm29, %v22, 0
    %54 = vmatpush.msra.mxu0 0.0
    %55 = vmatpush.msra.mxu0 0.0
    %56 = vmatpush.msra.mxu0 0.0
    %57 = vmatpush.msra.mxu0 0.0
    %58 = vmatpush.msra.mxu0 0.0
    %59 = vmatpush.msra.mxu0 0.0
    %60 = vmatpush.msra.mxu0 0.0
    %61 = vmatpush.msra.mxu0 0.0
    %62 = vmatpush.msra.mxu0 0.0
    %63 = vmatpush.msra.mxu0 0.0
    %64 = vmatpush.msra.mxu0 0.0
    %65 = vmatpush.msra.mxu0 0.0
    %66 = vmatpush.msra.mxu0 0.0
    %67 = vmatpush.msra.mxu0 0.0
    %68 = vmatpush.msra.mxu0 %v24
    %69 = vmatpush.msra.mxu0 %v23
    %70 = vmatmul.f32.gmra.mxu0 %v31
    %v71 = vpop.f32.mrf.mxu0
    %v72 = vadd.f32 %v27, %v71
    %73 = vmatmul.f32.gmra.mxu0 %v34
    %v74 = vpop.f32.mrf.mxu0
    %v75 = vadd.f32 %v27, %v74
    %76 = vmatmul.f32.gmra.mxu0 %v37
    %v77 = vpop.f32.mrf.mxu0
    %v78 = vadd.f32 %v27, %v77
    %79 = vmatmul.f32.gmra.mxu0 %v40
    %v80 = vpop.f32.mrf.mxu0
    %v81 = vadd.f32 %v27, %v80
    %82 = vmatmul.f32.gmra.mxu0 %v43
    %v83 = vpop.f32.mrf.mxu0
    %v84 = vadd.f32 %v27, %v83
    %85 = vmatmul.f32.gmra.mxu0 %v46
    %v86 = vpop.f32.mrf.mxu0
    %v87 = vadd.f32 %v27, %v86
    %88 = vmatmul.f32.gmra.mxu0 %v49
    %v89 = vpop.f32.mrf.mxu0
    %v90 = vadd.f32 %v27, %v89
    %91 = vmatmul.f32.gmra.mxu0 %v52
    %v92 = vpop.f32.mrf.mxu0
    %v93 = vadd.f32 %v27, %v92
    %94 = vdwg.mxu0
    %95 = vst [vmem:[#allocation2] sm:$0xff] %v72
    %96 = vst [vmem:[#allocation2 + $0x8] sm:$0xff] %v75
    %97 = vst [vmem:[#allocation2 + $0x10] sm:$0xff] %v78
    %98 = vst [vmem:[#allocation2 + $0x18] sm:$0xff] %v81
    %99 = vst [vmem:[#allocation2 + $0x20] sm:$0xff] %v84
    %100 = vst [vmem:[#allocation2 + $0x28] sm:$0xff] %v87
    %101 = vst [vmem:[#allocation2 + $0x30] sm:$0xff] %v90
    %102 = vst [vmem:[#allocation2 + $0x38] sm:$0xff] %v93
    // Predicated region
    $region14: #{tpu_custom_call.1} parent=1 // pred_check
      _
    $region15: #{tpu_custom_call.1} parent=1 // pred_check_branch
      %104 = sbr.rel (0) target = $region17
    $region16: #{tpu_custom_call.1} parent=1 // pred_region
      %106 = vsyncadd [#allocation3], 0
      %s107 = sshll.u32 [#allocation2], 4
      %s108 = int_to_ptr.vmem [resolvable:$true] %s107
      %s109 = sshll.u32 %s3, 4
      %s110 = int_to_ptr.hbm [resolvable:$true] %s109
      %115 = dma.vmem_to_hbm [thread:$0]  %s108, 1024, %s110, [#allocation3], 128, 128, 8
    $region17: #{tpu_custom_call.1} parent=1 // pred_fallthru
      _
    // Predicated region
    $region18: #{tpu_custom_call.1} parent=1 // pred_check
      _
    $region19: #{tpu_custom_call.1} parent=1 // pred_check_branch
      %117 = sbr.rel (0) target = $region21
    $region20: #{tpu_custom_call.1} parent=1 // pred_region
      %119 = dma.done [#allocation3], 1024
    $region21: #{tpu_custom_call.1} parent=1 // pred_fallthru
      _
    %120 = vsyncpa [#allocation3], 1

</llo_original>
